<compile_context>
chip_gen: v7x
topology: tpu7x:2x2x1
jax: 0.10.0
libtpu: 0.0.40
codegen_flags: <defaults>
</compile_context>

<pallas_src>
import functools
import math

import numpy as np
import jax
import jax.numpy as jnp
from jax.experimental import pallas as pl
from jax.experimental.pallas import tpu as pltpu

KERNLEN = 21
NSIG = 3
PAD = (KERNLEN - 1) // 2  # = 10, matches F.conv2d(padding=10)


def _gauss_kern1d():
    """Same math as basicsr's gauss_kernel() 1-D CDF-difference (float64)."""
    interval = (2 * NSIG + 1.0) / KERNLEN
    x = np.linspace(-NSIG - interval / 2.0, NSIG + interval / 2.0, KERNLEN + 1)
    cdf = np.array([0.5 * (1.0 + math.erf(v / math.sqrt(2.0))) for v in x],
                   dtype=np.float64)
    return np.diff(cdf)


def gauss_kernel_1d():
    """1-D factor u such that basicsr's 2-D kernel is exactly outer(u, u):
    kernel_raw = sqrt(outer(k1, k1)) = v v^T with v = sqrt(k1), and
    kernel = kernel_raw / kernel_raw.sum() = (v/sum(v)) (v/sum(v))^T."""
    v = np.sqrt(_gauss_kern1d())
    return (v / v.sum()).astype(np.float64)


def gauss_kernel_2d():
    """Full 2-D kernel, built exactly as the reference module does
    (only used by the pure-JAX correctness reference)."""
    k1 = _gauss_kern1d()
    kernel_raw = np.sqrt(np.outer(k1, k1))
    return (kernel_raw / kernel_raw.sum()).astype(np.float32)


def banded_blur_matrix(n, u):
    """M (n, n) with M[a, b] = u[a - b + PAD] inside the band, 0 outside:
    1-D conv (stride 1, zero padding PAD) expressed as y = x @ M."""
    idx = np.arange(n)
    d = idx[:, None] - idx[None, :] + PAD
    valid = (d >= 0) & (d < KERNLEN)
    m = np.where(valid, u[np.clip(d, 0, KERNLEN - 1)], 0.0)
    return m.astype(np.float32)


def _color_loss_kernel(x1_ref, x2_ref, tw_ref, th_ref, out_ref, zt_ref, *,
                       g, h, w):
    """One grid step = one chunk of `g` images ((g*h, w) rows of x1/x2)."""
    # Blur is linear -> subtract once, blur the difference.  Subtract in f32
    # (v5e has no bf16 VALU), then hand bf16 operands to the MXU.
    d = x1_ref[...].astype(jnp.float32) - x2_ref[...].astype(jnp.float32)

    # Width blur: one MXU pass over all g*h rows (large-M, packed LHS).
    z = jnp.dot(d.astype(jnp.bfloat16), tw_ref[...],
                preferred_element_type=jnp.float32)            # (g*h, w) f32

    # Height blur, batched into ONE matmul: per-image 2-D transpose (XLU slot,
    # hides under the MXU) into a (g*w, h) bf16 scratch.  `g` is VMEM-budgeted
    # small, so the static unroll of transpose+store stays cheap.
    for n in range(g):
        zt_ref[n * w:(n + 1) * w, :] = (
            z[n * h:(n + 1) * h, :].T.astype(jnp.bfloat16))
    y = jnp.dot(zt_ref[...], th_ref[...],
                preferred_element_type=jnp.float32)            # (g*w, h) f32

    # Single reduction per chunk (no per-image scalar chain); normalization
    # and the cross-chunk sum happen in the wrapper.
    out_ref[0, 0] = jnp.sum(y * y)


def color_loss(x1, x2):
    """Pallas implementation of ColorLoss.forward(x1, x2). Inputs: NCHW."""
    B, C, H, W = x1.shape
    assert x2.shape == x1.shape
    assert C == 3, "ColorLoss uses Blur(3): inputs must have 3 channels"
    N = B * C
    in_itemsize = x1.dtype.itemsize

    u = gauss_kernel_1d()
    # z = d @ TW blurs along W; y_t = z_n^T @ TH blurs along H
    # (TH[h, p] = u[h - p + PAD]; the Gaussian is symmetric).
    tw = jnp.asarray(banded_blur_matrix(W, u), dtype=jnp.bfloat16)   # (W, W)
    th = jnp.asarray(banded_blur_matrix(H, u), dtype=jnp.bfloat16)   # (H, H)

    # Free, contiguous reshapes; native dtype is streamed (no wrapper cast).
    x1f = x1.reshape(N * H, W)
    x2f = x2.reshape(N * H, W)

    # ---- generation-aware VMEM budgeting -> images per chunk (G) ----
    cap = 64 << 20                       # conservative fallback (v7x physical)
    try:
        cap = int(pltpu.get_tpu_info().vmem_capacity_bytes)
    except Exception:
        pass
    budget = min(cap // 2, 48 << 20)     # never request near-full VMEM

    # Per-image working set: double-buffered x1/x2 blocks (native dtype),
    # f32 d/z/y temporaries, bf16 transposed scratch.
    per_image = H * W * (4 * in_itemsize + 4 + 4 + 4 + 2)
    g_max = max(1, int(0.7 * budget) // per_image)
    candidates = [d for d in range(1, N + 1)
                  if N % d == 0 and d <= g_max and (d == N or (d * H) % 8 == 0)]
    G = max(candidates) if candidates else N
    num_chunks = N // G
    # TODO(synk): images so large that a single (H, W) plane overflows the VMEM
    # budget would additionally need intra-image row chunking of the width blur.

    est = G * per_image + 2 * (H * H + W * W) + (1 << 20)
    vmem_limit = int(min(max(budget, 2 * est), cap - (8 << 20)))

    flops = 2 * N * H * W * W + 2 * N * W * H * H + 5 * N * H * W
    bytes_accessed = (2 * N * H * W * in_itemsize
                      + 2 * (H * H + W * W) + 4 * num_chunks)

    kernel = functools.partial(_color_loss_kernel, g=G, h=H, w=W)
    partials = pl.pallas_call(
        kernel,
        out_shape=jax.ShapeDtypeStruct((num_chunks, 1), jnp.float32),
        grid=(num_chunks,),
        in_specs=[
            pl.BlockSpec((G * H, W), lambda i: (i, 0)),      # x1 chunk
            pl.BlockSpec((G * H, W), lambda i: (i, 0)),      # x2 chunk
            pl.BlockSpec((W, W), lambda i: (0, 0)),          # TW (stays resident)
            pl.BlockSpec((H, H), lambda i: (0, 0)),          # TH (stays resident)
        ],
        out_specs=pl.BlockSpec((1, 1), lambda i: (i, 0),
                               memory_space=pltpu.MemorySpace.SMEM),
        scratch_shapes=[pltpu.VMEM((G * W, H), jnp.bfloat16)],
        compiler_params=pltpu.CompilerParams(
            dimension_semantics=("parallel",),
            vmem_limit_bytes=vmem_limit),
        cost_estimate=pl.CostEstimate(flops=int(flops), transcendentals=0,
                                      bytes_accessed=int(bytes_accessed)),
    )(x1f, x2f, tw, th)

    return jnp.sum(partials) * (1.0 / (2.0 * B))


def color_loss_ref(x1, x2):
    """Pure-JAX reference (grouped 2-D conv, exactly like the PyTorch module)."""
    g = jnp.asarray(gauss_kernel_2d())
    w = jnp.broadcast_to(g[None, None], (3, 1, KERNLEN, KERNLEN))

    def blur(x):
        return jax.lax.conv_general_dilated(
            x, w, window_strides=(1, 1),
            padding=[(PAD, PAD), (PAD, PAD)],
            dimension_numbers=("NCHW", "OIHW", "NCHW"),
            feature_group_count=3,
            precision=jax.lax.Precision.HIGHEST)

    d = blur(x1) - blur(x2)
    return jnp.sum(d * d) / (2.0 * x1.shape[0])


if __name__ == "__main__":
    key = jax.random.PRNGKey(0)
    k1, k2 = jax.random.split(key)
    x1 = jax.random.normal(k1, (2, 3, 16, 16), dtype=jnp.float32)
    x2 = jax.random.normal(k2, (2, 3, 16, 16), dtype=jnp.float32)

    loss = color_loss(x1, x2)
    jax.block_until_ready(loss)

    ref = color_loss_ref(x1, x2)
    # bf16 MXU operands (f32 accumulation) vs the HIGHEST-precision f32 conv
    # reference -> slightly looser tolerance than a pure-f32 kernel would need.
    assert jnp.allclose(loss, ref, rtol=1e-2, atol=1e-4), (float(loss), float(ref))

    print("KERNEL_OK")
</pallas_src>

<mosaic_0001>
module attributes {stable_mosaic.version = 11 : i64} {
  func.func @_color_loss_kernel(%arg0: i32, %arg1: memref<96x16xf32, #tpu.memory_space<vmem>>, %arg2: memref<96x16xf32, #tpu.memory_space<vmem>>, %arg3: memref<16x16xbf16, #tpu.memory_space<vmem>>, %arg4: memref<16x16xbf16, #tpu.memory_space<vmem>>, %arg5: memref<1x1xf32, #tpu.memory_space<smem>>, %arg6: memref<96x16xbf16, #tpu.memory_space<vmem>>) attributes {dimension_semantics = [#tpu.dimension_semantics<parallel>], iteration_bounds = array<i64: 1>, scalar_prefetch = 0 : i64, scratch_operands = 1 : i64, tpu.core_type = #tpu.core_type<tc>, window_params = [{transform_indices = @transform_0, window_bounds = array<i64: 96, 16>}, {transform_indices = @transform_1, window_bounds = array<i64: 96, 16>}, {pipeline_mode = #tpu.pipeline_mode<synchronous>, transform_indices = @transform_2, window_bounds = array<i64: 16, 16>}, {pipeline_mode = #tpu.pipeline_mode<synchronous>, transform_indices = @transform_3, window_bounds = array<i64: 16, 16>}, {transform_indices = @transform_4, window_bounds = array<i64: 1, 1>}]} {
    %c0 = arith.constant 0 : index
    %c0_0 = arith.constant 0 : index
    %0 = vector.load %arg1[%c0, %c0_0] : memref<96x16xf32, #tpu.memory_space<vmem>>, vector<96x16xf32>
    %c0_1 = arith.constant 0 : index
    %c0_2 = arith.constant 0 : index
    %1 = vector.load %arg2[%c0_1, %c0_2] : memref<96x16xf32, #tpu.memory_space<vmem>>, vector<96x16xf32>
    %2 = arith.subf %0, %1 : vector<96x16xf32>
    %3 = arith.truncf %2 : vector<96x16xf32> to vector<96x16xbf16>
    %c0_3 = arith.constant 0 : index
    %c0_4 = arith.constant 0 : index
    %4 = vector.load %arg3[%c0_3, %c0_4] : memref<16x16xbf16, #tpu.memory_space<vmem>>, vector<16x16xbf16>
    %cst = arith.constant dense<0.000000e+00> : vector<96x16xf32>
    %5 = tpu.matmul %3, %4, %cst {dimension_numbers = #tpu.dot_dimension_numbers<[1], [0], [0], [1], [0, 0, 1, 1], [], []>} : vector<96x16xbf16>, vector<16x16xbf16>, vector<96x16xf32> -> vector<96x16xf32>
    %6 = vector.extract_strided_slice %5 {offsets = [0, 0], sizes = [16, 16], strides = [1, 1]} : vector<96x16xf32> to vector<16x16xf32>
    %7 = tpu.transpose %6, [1, 0] : vector<16x16xf32> -> vector<16x16xf32>
    %8 = arith.truncf %7 : vector<16x16xf32> to vector<16x16xbf16>
    %c0_5 = arith.constant 0 : index
    %c0_6 = arith.constant 0 : index
    %9 = vector.load %arg6[%c0_5, %c0_6] : memref<96x16xbf16, #tpu.memory_space<vmem>>, vector<16x16xbf16>
    tpu.vector_store %arg6[%c0_5, %c0_6], %8 {strides = array<i32>} : memref<96x16xbf16, #tpu.memory_space<vmem>>, vector<16x16xbf16>,
    %10 = vector.extract_strided_slice %5 {offsets = [16, 0], sizes = [16, 16], strides = [1, 1]} : vector<96x16xf32> to vector<16x16xf32>
    %11 = tpu.transpose %10, [1, 0] : vector<16x16xf32> -> vector<16x16xf32>
    %12 = arith.truncf %11 : vector<16x16xf32> to vector<16x16xbf16>
    %c16 = arith.constant 16 : index
    %c0_7 = arith.constant 0 : index
    %13 = vector.load %arg6[%c16, %c0_7] : memref<96x16xbf16, #tpu.memory_space<vmem>>, vector<16x16xbf16>
    tpu.vector_store %arg6[%c16, %c0_7], %12 {strides = array<i32>} : memref<96x16xbf16, #tpu.memory_space<vmem>>, vector<16x16xbf16>,
    %14 = vector.extract_strided_slice %5 {offsets = [32, 0], sizes = [16, 16], strides = [1, 1]} : vector<96x16xf32> to vector<16x16xf32>
    %15 = tpu.transpose %14, [1, 0] : vector<16x16xf32> -> vector<16x16xf32>
    %16 = arith.truncf %15 : vector<16x16xf32> to vector<16x16xbf16>
    %c32 = arith.constant 32 : index
    %c0_8 = arith.constant 0 : index
    %17 = vector.load %arg6[%c32, %c0_8] : memref<96x16xbf16, #tpu.memory_space<vmem>>, vector<16x16xbf16>
    tpu.vector_store %arg6[%c32, %c0_8], %16 {strides = array<i32>} : memref<96x16xbf16, #tpu.memory_space<vmem>>, vector<16x16xbf16>,
    %18 = vector.extract_strided_slice %5 {offsets = [48, 0], sizes = [16, 16], strides = [1, 1]} : vector<96x16xf32> to vector<16x16xf32>
    %19 = tpu.transpose %18, [1, 0] : vector<16x16xf32> -> vector<16x16xf32>
    %20 = arith.truncf %19 : vector<16x16xf32> to vector<16x16xbf16>
    %c48 = arith.constant 48 : index
    %c0_9 = arith.constant 0 : index
    %21 = vector.load %arg6[%c48, %c0_9] : memref<96x16xbf16, #tpu.memory_space<vmem>>, vector<16x16xbf16>
    tpu.vector_store %arg6[%c48, %c0_9], %20 {strides = array<i32>} : memref<96x16xbf16, #tpu.memory_space<vmem>>, vector<16x16xbf16>,
    %22 = vector.extract_strided_slice %5 {offsets = [64, 0], sizes = [16, 16], strides = [1, 1]} : vector<96x16xf32> to vector<16x16xf32>
    %23 = tpu.transpose %22, [1, 0] : vector<16x16xf32> -> vector<16x16xf32>
    %24 = arith.truncf %23 : vector<16x16xf32> to vector<16x16xbf16>
    %c64 = arith.constant 64 : index
    %c0_10 = arith.constant 0 : index
    %25 = vector.load %arg6[%c64, %c0_10] : memref<96x16xbf16, #tpu.memory_space<vmem>>, vector<16x16xbf16>
    tpu.vector_store %arg6[%c64, %c0_10], %24 {strides = array<i32>} : memref<96x16xbf16, #tpu.memory_space<vmem>>, vector<16x16xbf16>,
    %26 = vector.extract_strided_slice %5 {offsets = [80, 0], sizes = [16, 16], strides = [1, 1]} : vector<96x16xf32> to vector<16x16xf32>
    %27 = tpu.transpose %26, [1, 0] : vector<16x16xf32> -> vector<16x16xf32>
    %28 = arith.truncf %27 : vector<16x16xf32> to vector<16x16xbf16>
    %c80 = arith.constant 80 : index
    %c0_11 = arith.constant 0 : index
    %29 = vector.load %arg6[%c80, %c0_11] : memref<96x16xbf16, #tpu.memory_space<vmem>>, vector<16x16xbf16>
    tpu.vector_store %arg6[%c80, %c0_11], %28 {strides = array<i32>} : memref<96x16xbf16, #tpu.memory_space<vmem>>, vector<16x16xbf16>,
    %c0_12 = arith.constant 0 : index
    %c0_13 = arith.constant 0 : index
    %30 = vector.load %arg6[%c0_12, %c0_13] : memref<96x16xbf16, #tpu.memory_space<vmem>>, vector<96x16xbf16>
    %c0_14 = arith.constant 0 : index
    %c0_15 = arith.constant 0 : index
    %31 = vector.load %arg4[%c0_14, %c0_15] : memref<16x16xbf16, #tpu.memory_space<vmem>>, vector<16x16xbf16>
    %cst_16 = arith.constant dense<0.000000e+00> : vector<96x16xf32>
    %32 = tpu.matmul %30, %31, %cst_16 {dimension_numbers = #tpu.dot_dimension_numbers<[1], [0], [0], [1], [0, 0, 1, 1], [], []>} : vector<96x16xbf16>, vector<16x16xbf16>, vector<96x16xf32> -> vector<96x16xf32>
    %33 = arith.mulf %32, %32 : vector<96x16xf32>
    %34 = vector.shape_cast %33 : vector<96x16xf32> to vector<1x96x16xf32>
    %cst_17 = arith.constant dense<0.000000e+00> : vector<1xf32>
    %35 = vector.multi_reduction <add>, %34, %cst_17 [1, 2] : vector<1x96x16xf32> to vector<1xf32>
    %36 = vector.shape_cast %35 : vector<1xf32> to vector<1x1x1xf32>
    %37 = vector.extract %36[0, 0, 0] : f32 from vector<1x1x1xf32>
    %c0_18 = arith.constant 0 : index
    %c0_19 = arith.constant 0 : index
    %38 = memref.load %arg5[%c0_18, %c0_19] : memref<1x1xf32, #tpu.memory_space<smem>>
    memref.store %37, %arg5[%c0_18, %c0_19] : memref<1x1xf32, #tpu.memory_space<smem>>
    return
  }
  func.func @transform_0(%arg0: i32) -> (i32, i32) {
    %c0_i32 = arith.constant 0 : i32
    %c0_i32_0 = arith.constant 0 : i32
    return %arg0, %c0_i32 : i32, i32
  }
  func.func @transform_1(%arg0: i32) -> (i32, i32) {
    %c0_i32 = arith.constant 0 : i32
    %c0_i32_0 = arith.constant 0 : i32
    return %arg0, %c0_i32 : i32, i32
  }
  func.func @transform_2(%arg0: i32) -> (i32, i32) {
    %c0_i32 = arith.constant 0 : i32
    %c0_i32_0 = arith.constant 0 : i32
    %c0_i32_1 = arith.constant 0 : i32
    return %c0_i32, %c0_i32_0 : i32, i32
  }
  func.func @transform_3(%arg0: i32) -> (i32, i32) {
    %c0_i32 = arith.constant 0 : i32
    %c0_i32_0 = arith.constant 0 : i32
    %c0_i32_1 = arith.constant 0 : i32
    return %c0_i32, %c0_i32_0 : i32, i32
  }
  func.func @transform_4(%arg0: i32) -> (i32, i32) {
    %c0_i32 = arith.constant 0 : i32
    %c0_i32_0 = arith.constant 0 : i32
    return %arg0, %c0_i32 : i32, i32
  }
}

</mosaic_0001>

<llo_original>
// kernel: tpu_custom_call.1
$region0: #{tpu_custom_call.1}
  #allocation0 [shape = 'u32[]', space=smem, size = 0x4, offset = 0x4, fixed_abs, tag = 'smem constant byte address 0x4 - core index']
  #allocation1 [shape = 'u32[144,128]{1,0:T(1,128)}', space=vmem, size = 0x12000, scoped, tag = 'internal scratch']
  #allocation2 [shape = 'bf16[96,16]{1,0:T(16,128)(2,1)}', space=vmem, size = 0x6000, scoped, tag = 'scratch operand']
  %s0 = inlined_call_operand.vmem [shape: f32[96,16], index: 0, kind: input, shape index: {}]
  %s1 = inlined_call_operand.vmem [shape: f32[96,16], index: 1, kind: input, shape index: {}]
  %s2 = inlined_call_operand.vmem [shape: bf16[16,16], index: 2, kind: input, shape index: {}]
  %s3 = inlined_call_operand.vmem [shape: bf16[16,16], index: 3, kind: input, shape index: {}]
  %s4 = inlined_call_operand.hbm [shape: f32[1,1], index: 4, kind: output, shape index: {}]
  %s5 = sld [smem:[#allocation0]]
  $region26: #{tpu_custom_call.1} parent=0
    _
  %s7 = ssub.s32 1, %s5
  %s8 = scalar_select 0, %s7, %s5
  $region1: #{tpu_custom_call.1} parent=0
    #allocation3 [shape = 'u8[512]{0}', space=smem, size = 0x200, scoped, tag = 'output window, operand 0, single buffered']
    #allocation4 [shape = 's32[1]{0}', space=sflag, size = 0x4, scoped, tag = 'scoped memory for tpu_custom_call.1']
    %9 = vsyncpa [#allocation4], 0
    // Predicated region
    $region2: #{tpu_custom_call.1} parent=1 // pred_check
      _
    $region3: #{tpu_custom_call.1} parent=1 // pred_check_branch
      %11 = sbr.rel (0) target = $region5
    $region4: #{tpu_custom_call.1} parent=1 // pred_region
      _
    $region5: #{tpu_custom_call.1} parent=1 // pred_fallthru
      _
    // Predicated region
    $region6: #{tpu_custom_call.1} parent=1 // pred_check
      _
    $region7: #{tpu_custom_call.1} parent=1 // pred_check_branch
      %13 = sbr.rel (0) target = $region9
    $region8: #{tpu_custom_call.1} parent=1 // pred_region
      _
    $region9: #{tpu_custom_call.1} parent=1 // pred_fallthru
      _
    // Predicated region
    $region10: #{tpu_custom_call.1} parent=1 // pred_check
      _
    $region11: #{tpu_custom_call.1} parent=1 // pred_check_branch
      %15 = sbr.rel (0) target = $region13
    $region12: #{tpu_custom_call.1} parent=1 // pred_region
      _
    $region13: #{tpu_custom_call.1} parent=1 // pred_fallthru
      _
    // Predicated region
    $region14: #{tpu_custom_call.1} parent=1 // pred_check
      _
    $region15: #{tpu_custom_call.1} parent=1 // pred_check_branch
      %17 = sbr.rel (0) target = $region17
    $region16: #{tpu_custom_call.1} parent=1 // pred_region
      _
    $region17: #{tpu_custom_call.1} parent=1 // pred_fallthru
      _
    %v19 = vld [vmem:[%s0] sm:$0xff]
    %v20 = vld [vmem:[%s0 + $0x8] sm:$0xff]
    %v21 = vld [vmem:[%s0 + $0x10] sm:$0xff]
    %v22 = vld [vmem:[%s0 + $0x18] sm:$0xff]
    %v23 = vld [vmem:[%s0 + $0x20] sm:$0xff]
    %v24 = vld [vmem:[%s0 + $0x28] sm:$0xff]
    %v25 = vld [vmem:[%s0 + $0x30] sm:$0xff]
    %v26 = vld [vmem:[%s0 + $0x38] sm:$0xff]
    %v27 = vld [vmem:[%s0 + $0x40] sm:$0xff]
    %v28 = vld [vmem:[%s0 + $0x48] sm:$0xff]
    %v29 = vld [vmem:[%s0 + $0x50] sm:$0xff]
    %v30 = vld [vmem:[%s0 + $0x58] sm:$0xff]
    %v31 = vld [vmem:[%s1] sm:$0xff]
    %v32 = vld [vmem:[%s1 + $0x8] sm:$0xff]
    %v33 = vld [vmem:[%s1 + $0x10] sm:$0xff]
    %v34 = vld [vmem:[%s1 + $0x18] sm:$0xff]
    %v35 = vld [vmem:[%s1 + $0x20] sm:$0xff]
    %v36 = vld [vmem:[%s1 + $0x28] sm:$0xff]
    %v37 = vld [vmem:[%s1 + $0x30] sm:$0xff]
    %v38 = vld [vmem:[%s1 + $0x38] sm:$0xff]
    %v39 = vld [vmem:[%s1 + $0x40] sm:$0xff]
    %v40 = vld [vmem:[%s1 + $0x48] sm:$0xff]
    %v41 = vld [vmem:[%s1 + $0x50] sm:$0xff]
    %v42 = vld [vmem:[%s1 + $0x58] sm:$0xff]
    %v43 = vsub.f32 %v19, %v31
    %v44 = vsub.f32 %v20, %v32
    %v45 = vsub.f32 %v21, %v33
    %v46 = vsub.f32 %v22, %v34
    %v47 = vsub.f32 %v23, %v35
    %v48 = vsub.f32 %v24, %v36
    %v49 = vsub.f32 %v25, %v37
    %v50 = vsub.f32 %v26, %v38
    %v51 = vsub.f32 %v27, %v39
    %v52 = vsub.f32 %v28, %v40
    %v53 = vsub.f32 %v29, %v41
    %v54 = vsub.f32 %v30, %v42
    %v55 = vpack.c.bf16 %v44, %v43
    %v56 = vpack.c.bf16 %v46, %v45
    %v57 = vpack.c.bf16 %v48, %v47
    %v58 = vpack.c.bf16 %v50, %v49
    %v59 = vpack.c.bf16 %v52, %v51
    %v60 = vpack.c.bf16 %v54, %v53
    %v61 = vld [vmem:[%s2] sm:$0xf]
    %v62 = vld [vmem:[%s2 + $0x4] sm:$0xf]
    %v65 = vunpack.c.l.b16 %v61
    %v66 = vunpack.c.l.b16 %v62
    %v67 = vpack.c.b16 %v66, %v65
    %vm69 = vcmask 130048
    %v71 = vsel %vm69, %v55, 0
    %v74 = vsel %vm69, %v56, 0
    %v77 = vsel %vm69, %v57, 0
    %v80 = vsel %vm69, %v58, 0
    %v83 = vsel %vm69, %v59, 0
    %v86 = vsel %vm69, %v60, 0
    %88 = vmatprep.subr.bf16.mxu0 0
    %89 = vmatpush1.bf16.msra.mxu0 %v67
    %90 = vmatprep.subr.bf16.mxu0 0
    %91 = vmatpush1.bf16.msra.mxu0 0
    %92 = vmatprep.subr.bf16.mxu0 0
    %93 = vmatpush1.bf16.msra.mxu0 0
    %94 = vmatprep.subr.bf16.mxu0 0
    %95 = vmatpush1.bf16.msra.mxu0 0
    %96 = vmatprep.subr.bf16.mxu0 0
    %97 = vmatpush1.bf16.msra.mxu0 0
    %98 = vmatprep.subr.bf16.mxu0 0
    %99 = vmatpush1.bf16.msra.mxu0 0
    %100 = vmatprep.subr.bf16.mxu0 0
    %101 = vmatpush1.bf16.msra.mxu0 0
    %102 = vmatprep.subr.bf16.mxu0 0
    %103 = vmatpush1.bf16.msra.mxu0 0
    %104 = vmatprep.subr.bf16.mxu0 0
    %105 = vmatpush1.bf16.msra.mxu0 0
    %106 = vmatprep.subr.bf16.mxu0 0
    %107 = vmatpush1.bf16.msra.mxu0 0
    %108 = vmatprep.subr.bf16.mxu0 0
    %109 = vmatpush1.bf16.msra.mxu0 0
    %110 = vmatprep.subr.bf16.mxu0 0
    %111 = vmatpush1.bf16.msra.mxu0 0
    %112 = vmatprep.subr.bf16.mxu0 0
    %113 = vmatpush1.bf16.msra.mxu0 0
    %114 = vmatprep.subr.bf16.mxu0 0
    %115 = vmatpush1.bf16.msra.mxu0 0
    %116 = vmatprep.subr.bf16.mxu0 0
    %117 = vmatpush1.bf16.msra.mxu0 0
    %118 = vmatprep.subr.bf16.mxu0 0
    %119 = vmatpush1.bf16.msra.mxu0 0
    %120 = vmatprep.mubr.bf16.mxu0 0
    %121 = vmatmul.mubr.bf16.gmra.mrb[0].mxu0 %v71
    %v122 = vpop.f32.mrb[0].mxu0
    %v123 = vadd.f32 0.0, %v122
    %v124 = vpop.f32.mrb[0].mxu0
    %v125 = vpop.f32.mrb[0].mxu0
    %v126 = vadd.f32 0.0, %v125
    %v127 = vpop.f32.mrb[0].mxu0
    %128 = vmatprep.mubr.bf16.mxu0 0
    %129 = vmatmul.mubr.bf16.gmra.mrb[0].mxu0 %v74
    %v130 = vpop.f32.mrb[0].mxu0
    %v131 = vadd.f32 0.0, %v130
    %v132 = vpop.f32.mrb[0].mxu0
    %v133 = vpop.f32.mrb[0].mxu0
    %v134 = vadd.f32 0.0, %v133
    %v135 = vpop.f32.mrb[0].mxu0
    %136 = vmatprep.mubr.bf16.mxu0 0
    %137 = vmatmul.mubr.bf16.gmra.mrb[0].mxu0 %v77
    %v138 = vpop.f32.mrb[0].mxu0
    %v139 = vadd.f32 0.0, %v138
    %v140 = vpop.f32.mrb[0].mxu0
    %v141 = vpop.f32.mrb[0].mxu0
    %v142 = vadd.f32 0.0, %v141
    %v143 = vpop.f32.mrb[0].mxu0
    %144 = vmatprep.mubr.bf16.mxu0 0
    %145 = vmatmul.mubr.bf16.gmra.mrb[0].mxu0 %v80
    %v146 = vpop.f32.mrb[0].mxu0
    %v147 = vadd.f32 0.0, %v146
    %v148 = vpop.f32.mrb[0].mxu0
    %v149 = vpop.f32.mrb[0].mxu0
    %v150 = vadd.f32 0.0, %v149
    %v151 = vpop.f32.mrb[0].mxu0
    %152 = vmatprep.mubr.bf16.mxu0 0
    %153 = vmatmul.mubr.bf16.gmra.mrb[0].mxu0 %v83
    %v154 = vpop.f32.mrb[0].mxu0
    %v155 = vadd.f32 0.0, %v154
    %v156 = vpop.f32.mrb[0].mxu0
    %v157 = vpop.f32.mrb[0].mxu0
    %v158 = vadd.f32 0.0, %v157
    %v159 = vpop.f32.mrb[0].mxu0
    %160 = vmatprep.mubr.bf16.mxu0 0
    %161 = vmatmul.mubr.bf16.gmra.mrb[0].mxu0 %v86
    %v162 = vpop.f32.mrb[0].mxu0
    %v163 = vadd.f32 0.0, %v162
    %v164 = vpop.f32.mrb[0].mxu0
    %v165 = vpop.f32.mrb[0].mxu0
    %v166 = vadd.f32 0.0, %v165
    %v167 = vpop.f32.mrb[0].mxu0
    %168 = vdwg.mxu0
    %169 = vxpose.xlu0.b32.start [1/16] %v123, 128
    %170 = vxpose.xlu0.b32.cont [2/16] %v126, 128
    %171 = vxpose.xlu0.b32.cont [3/16] 0.0, 128
    %172 = vxpose.xlu0.b32.cont [4/16] 0.0, 128
    %173 = vxpose.xlu0.b32.cont [5/16] 0.0, 128
    %174 = vxpose.xlu0.b32.cont [6/16] 0.0, 128
    %175 = vxpose.xlu0.b32.cont [7/16] 0.0, 128
    %176 = vxpose.xlu0.b32.cont [8/16] 0.0, 128
    %177 = vxpose.xlu0.b32.cont [9/16] 0.0, 128
    %178 = vxpose.xlu0.b32.cont [10/16] 0.0, 128
    %179 = vxpose.xlu0.b32.cont [11/16] 0.0, 128
    %180 = vxpose.xlu0.b32.cont [12/16] 0.0, 128
    %181 = vxpose.xlu0.b32.cont [13/16] 0.0, 128
    %182 = vxpose.xlu0.b32.cont [14/16] 0.0, 128
    %183 = vxpose.xlu0.b32.cont [15/16] 0.0, 128
    %184 = vxpose.xlu0.b32.end [16/16] 0.0, 128
    %v185 = vpop.trf.xlu0
    %v186 = vpop.trf.xlu0
    %v187 = vpop.trf.xlu0
    %v188 = vpop.trf.xlu0
    %v189 = vpop.trf.xlu0
    %v190 = vpop.trf.xlu0
    %v191 = vpop.trf.xlu0
    %v192 = vpop.trf.xlu0
    %v193 = vpop.trf.xlu0
    %v194 = vpop.trf.xlu0
    %v195 = vpop.trf.xlu0
    %v196 = vpop.trf.xlu0
    %v197 = vpop.trf.xlu0
    %v198 = vpop.trf.xlu0
    %v199 = vpop.trf.xlu0
    %v200 = vpop.trf.xlu0
    %v201 = vpack.c.bf16 %v186, %v185
    %202 = vst.msk [vmem:[#allocation2] sm:$0xff] %vm69, %v201
    %203 = vxpose.xlu0.b32.start [1/16] %v131, 128
    %204 = vxpose.xlu0.b32.cont [2/16] %v134, 128
    %205 = vxpose.xlu0.b32.cont [3/16] 0.0, 128
    %206 = vxpose.xlu0.b32.cont [4/16] 0.0, 128
    %207 = vxpose.xlu0.b32.cont [5/16] 0.0, 128
    %208 = vxpose.xlu0.b32.cont [6/16] 0.0, 128
    %209 = vxpose.xlu0.b32.cont [7/16] 0.0, 128
    %210 = vxpose.xlu0.b32.cont [8/16] 0.0, 128
    %211 = vxpose.xlu0.b32.cont [9/16] 0.0, 128
    %212 = vxpose.xlu0.b32.cont [10/16] 0.0, 128
    %213 = vxpose.xlu0.b32.cont [11/16] 0.0, 128
    %214 = vxpose.xlu0.b32.cont [12/16] 0.0, 128
    %215 = vxpose.xlu0.b32.cont [13/16] 0.0, 128
    %216 = vxpose.xlu0.b32.cont [14/16] 0.0, 128
    %217 = vxpose.xlu0.b32.cont [15/16] 0.0, 128
    %218 = vxpose.xlu0.b32.end [16/16] 0.0, 128
    %v219 = vpop.trf.xlu0
    %v220 = vpop.trf.xlu0
    %v221 = vpop.trf.xlu0
    %v222 = vpop.trf.xlu0
    %v223 = vpop.trf.xlu0
    %v224 = vpop.trf.xlu0
    %v225 = vpop.trf.xlu0
    %v226 = vpop.trf.xlu0
    %v227 = vpop.trf.xlu0
    %v228 = vpop.trf.xlu0
    %v229 = vpop.trf.xlu0
    %v230 = vpop.trf.xlu0
    %v231 = vpop.trf.xlu0
    %v232 = vpop.trf.xlu0
    %v233 = vpop.trf.xlu0
    %v234 = vpop.trf.xlu0
    %v235 = vpack.c.bf16 %v220, %v219
    %236 = vst.msk [vmem:[#allocation2 + $0x8] sm:$0xff] %vm69, %v235
    %237 = vxpose.xlu0.b32.start [1/16] %v139, 128
    %238 = vxpose.xlu0.b32.cont [2/16] %v142, 128
    %239 = vxpose.xlu0.b32.cont [3/16] 0.0, 128
    %240 = vxpose.xlu0.b32.cont [4/16] 0.0, 128
    %241 = vxpose.xlu0.b32.cont [5/16] 0.0, 128
    %242 = vxpose.xlu0.b32.cont [6/16] 0.0, 128
    %243 = vxpose.xlu0.b32.cont [7/16] 0.0, 128
    %244 = vxpose.xlu0.b32.cont [8/16] 0.0, 128
    %245 = vxpose.xlu0.b32.cont [9/16] 0.0, 128
    %246 = vxpose.xlu0.b32.cont [10/16] 0.0, 128
    %247 = vxpose.xlu0.b32.cont [11/16] 0.0, 128
    %248 = vxpose.xlu0.b32.cont [12/16] 0.0, 128
    %249 = vxpose.xlu0.b32.cont [13/16] 0.0, 128
    %250 = vxpose.xlu0.b32.cont [14/16] 0.0, 128
    %251 = vxpose.xlu0.b32.cont [15/16] 0.0, 128
    %252 = vxpose.xlu0.b32.end [16/16] 0.0, 128
    %v253 = vpop.trf.xlu0
    %v254 = vpop.trf.xlu0
    %v255 = vpop.trf.xlu0
    %v256 = vpop.trf.xlu0
    %v257 = vpop.trf.xlu0
    %v258 = vpop.trf.xlu0
    %v259 = vpop.trf.xlu0
    %v260 = vpop.trf.xlu0
    %v261 = vpop.trf.xlu0
    %v262 = vpop.trf.xlu0
    %v263 = vpop.trf.xlu0
    %v264 = vpop.trf.xlu0
    %v265 = vpop.trf.xlu0
    %v266 = vpop.trf.xlu0
    %v267 = vpop.trf.xlu0
    %v268 = vpop.trf.xlu0
    %v269 = vpack.c.bf16 %v254, %v253
    %270 = vst.msk [vmem:[#allocation2 + $0x10] sm:$0xff] %vm69, %v269
    %271 = vxpose.xlu0.b32.start [1/16] %v147, 128
    %272 = vxpose.xlu0.b32.cont [2/16] %v150, 128
    %273 = vxpose.xlu0.b32.cont [3/16] 0.0, 128
    %274 = vxpose.xlu0.b32.cont [4/16] 0.0, 128
    %275 = vxpose.xlu0.b32.cont [5/16] 0.0, 128
    %276 = vxpose.xlu0.b32.cont [6/16] 0.0, 128
    %277 = vxpose.xlu0.b32.cont [7/16] 0.0, 128
    %278 = vxpose.xlu0.b32.cont [8/16] 0.0, 128
    %279 = vxpose.xlu0.b32.cont [9/16] 0.0, 128
    %280 = vxpose.xlu0.b32.cont [10/16] 0.0, 128
    %281 = vxpose.xlu0.b32.cont [11/16] 0.0, 128
    %282 = vxpose.xlu0.b32.cont [12/16] 0.0, 128
    %283 = vxpose.xlu0.b32.cont [13/16] 0.0, 128
    %284 = vxpose.xlu0.b32.cont [14/16] 0.0, 128
    %285 = vxpose.xlu0.b32.cont [15/16] 0.0, 128
    %286 = vxpose.xlu0.b32.end [16/16] 0.0, 128
    %v287 = vpop.trf.xlu0
    %v288 = vpop.trf.xlu0
    %v289 = vpop.trf.xlu0
    %v290 = vpop.trf.xlu0
    %v291 = vpop.trf.xlu0
    %v292 = vpop.trf.xlu0
    %v293 = vpop.trf.xlu0
    %v294 = vpop.trf.xlu0
    %v295 = vpop.trf.xlu0
    %v296 = vpop.trf.xlu0
    %v297 = vpop.trf.xlu0
    %v298 = vpop.trf.xlu0
    %v299 = vpop.trf.xlu0
    %v300 = vpop.trf.xlu0
    %v301 = vpop.trf.xlu0
    %v302 = vpop.trf.xlu0
    %v303 = vpack.c.bf16 %v288, %v287
    %304 = vst.msk [vmem:[#allocation2 + $0x18] sm:$0xff] %vm69, %v303
    %305 = vxpose.xlu0.b32.start [1/16] %v155, 128
    %306 = vxpose.xlu0.b32.cont [2/16] %v158, 128
    %307 = vxpose.xlu0.b32.cont [3/16] 0.0, 128
    %308 = vxpose.xlu0.b32.cont [4/16] 0.0, 128
    %309 = vxpose.xlu0.b32.cont [5/16] 0.0, 128
    %310 = vxpose.xlu0.b32.cont [6/16] 0.0, 128
    %311 = vxpose.xlu0.b32.cont [7/16] 0.0, 128
    %312 = vxpose.xlu0.b32.cont [8/16] 0.0, 128
    %313 = vxpose.xlu0.b32.cont [9/16] 0.0, 128
    %314 = vxpose.xlu0.b32.cont [10/16] 0.0, 128
    %315 = vxpose.xlu0.b32.cont [11/16] 0.0, 128
    %316 = vxpose.xlu0.b32.cont [12/16] 0.0, 128
    %317 = vxpose.xlu0.b32.cont [13/16] 0.0, 128
    %318 = vxpose.xlu0.b32.cont [14/16] 0.0, 128
    %319 = vxpose.xlu0.b32.cont [15/16] 0.0, 128
    %320 = vxpose.xlu0.b32.end [16/16] 0.0, 128
    %v321 = vpop.trf.xlu0
    %v322 = vpop.trf.xlu0
    %v323 = vpop.trf.xlu0
    %v324 = vpop.trf.xlu0
    %v325 = vpop.trf.xlu0
    %v326 = vpop.trf.xlu0
    %v327 = vpop.trf.xlu0
    %v328 = vpop.trf.xlu0
    %v329 = vpop.trf.xlu0
    %v330 = vpop.trf.xlu0
    %v331 = vpop.trf.xlu0
    %v332 = vpop.trf.xlu0
    %v333 = vpop.trf.xlu0
    %v334 = vpop.trf.xlu0
    %v335 = vpop.trf.xlu0
    %v336 = vpop.trf.xlu0
    %v337 = vpack.c.bf16 %v322, %v321
    %338 = vst.msk [vmem:[#allocation2 + $0x20] sm:$0xff] %vm69, %v337
    %339 = vxpose.xlu0.b32.start [1/16] %v163, 128
    %340 = vxpose.xlu0.b32.cont [2/16] %v166, 128
    %341 = vxpose.xlu0.b32.cont [3/16] 0.0, 128
    %342 = vxpose.xlu0.b32.cont [4/16] 0.0, 128
    %343 = vxpose.xlu0.b32.cont [5/16] 0.0, 128
    %344 = vxpose.xlu0.b32.cont [6/16] 0.0, 128
    %345 = vxpose.xlu0.b32.cont [7/16] 0.0, 128
    %346 = vxpose.xlu0.b32.cont [8/16] 0.0, 128
    %347 = vxpose.xlu0.b32.cont [9/16] 0.0, 128
    %348 = vxpose.xlu0.b32.cont [10/16] 0.0, 128
    %349 = vxpose.xlu0.b32.cont [11/16] 0.0, 128
    %350 = vxpose.xlu0.b32.cont [12/16] 0.0, 128
    %351 = vxpose.xlu0.b32.cont [13/16] 0.0, 128
    %352 = vxpose.xlu0.b32.cont [14/16] 0.0, 128
    %353 = vxpose.xlu0.b32.cont [15/16] 0.0, 128
    %354 = vxpose.xlu0.b32.end [16/16] 0.0, 128
    %v355 = vpop.trf.xlu0
    %v356 = vpop.trf.xlu0
    %v357 = vpop.trf.xlu0
    %v358 = vpop.trf.xlu0
    %v359 = vpop.trf.xlu0
    %v360 = vpop.trf.xlu0
    %v361 = vpop.trf.xlu0
    %v362 = vpop.trf.xlu0
    %v363 = vpop.trf.xlu0
    %v364 = vpop.trf.xlu0
    %v365 = vpop.trf.xlu0
    %v366 = vpop.trf.xlu0
    %v367 = vpop.trf.xlu0
    %v368 = vpop.trf.xlu0
    %v369 = vpop.trf.xlu0
    %v370 = vpop.trf.xlu0
    %v371 = vpack.c.bf16 %v356, %v355
    %372 = vst.msk [vmem:[#allocation2 + $0x28] sm:$0xff] %vm69, %v371
    %v373 = vld [vmem:[#allocation2] sm:$0xff]
    %v374 = vld [vmem:[#allocation2 + $0x8] sm:$0xff]
    %v375 = vld [vmem:[#allocation2 + $0x10] sm:$0xff]
    %v376 = vld [vmem:[#allocation2 + $0x18] sm:$0xff]
    %v377 = vld [vmem:[#allocation2 + $0x20] sm:$0xff]
    %v378 = vld [vmem:[#allocation2 + $0x28] sm:$0xff]
    %v379 = vld [vmem:[%s3] sm:$0xf]
    %v380 = vld [vmem:[%s3 + $0x4] sm:$0xf]
    %v383 = vunpack.c.l.b16 %v379
    %v384 = vunpack.c.l.b16 %v380
    %v385 = vpack.c.b16 %v384, %v383
    %v388 = vsel %vm69, %v373, 0
    %v391 = vsel %vm69, %v374, 0
    %v394 = vsel %vm69, %v375, 0
    %v397 = vsel %vm69, %v376, 0
    %v400 = vsel %vm69, %v377, 0
    %v403 = vsel %vm69, %v378, 0
    %405 = vmatprep.subr.bf16.mxu0 0
    %406 = vmatpush1.bf16.msra.mxu0 %v385
    %407 = vmatprep.subr.bf16.mxu0 0
    %408 = vmatpush1.bf16.msra.mxu0 0
    %409 = vmatprep.subr.bf16.mxu0 0
    %410 = vmatpush1.bf16.msra.mxu0 0
    %411 = vmatprep.subr.bf16.mxu0 0
    %412 = vmatpush1.bf16.msra.mxu0 0
    %413 = vmatprep.subr.bf16.mxu0 0
    %414 = vmatpush1.bf16.msra.mxu0 0
    %415 = vmatprep.subr.bf16.mxu0 0
    %416 = vmatpush1.bf16.msra.mxu0 0
    %417 = vmatprep.subr.bf16.mxu0 0
    %418 = vmatpush1.bf16.msra.mxu0 0
    %419 = vmatprep.subr.bf16.mxu0 0
    %420 = vmatpush1.bf16.msra.mxu0 0
    %421 = vmatprep.subr.bf16.mxu0 0
    %422 = vmatpush1.bf16.msra.mxu0 0
    %423 = vmatprep.subr.bf16.mxu0 0
    %424 = vmatpush1.bf16.msra.mxu0 0
    %425 = vmatprep.subr.bf16.mxu0 0
    %426 = vmatpush1.bf16.msra.mxu0 0
    %427 = vmatprep.subr.bf16.mxu0 0
    %428 = vmatpush1.bf16.msra.mxu0 0
    %429 = vmatprep.subr.bf16.mxu0 0
    %430 = vmatpush1.bf16.msra.mxu0 0
    %431 = vmatprep.subr.bf16.mxu0 0
    %432 = vmatpush1.bf16.msra.mxu0 0
    %433 = vmatprep.subr.bf16.mxu0 0
    %434 = vmatpush1.bf16.msra.mxu0 0
    %435 = vmatprep.subr.bf16.mxu0 0
    %436 = vmatpush1.bf16.msra.mxu0 0
    %437 = vmatprep.mubr.bf16.mxu0 0
    %438 = vmatmul.mubr.bf16.gmra.mrb[0].mxu0 %v388
    %v439 = vpop.f32.mrb[0].mxu0
    %v440 = vadd.f32 0.0, %v439
    %v441 = vpop.f32.mrb[0].mxu0
    %v442 = vpop.f32.mrb[0].mxu0
    %v443 = vadd.f32 0.0, %v442
    %v444 = vpop.f32.mrb[0].mxu0
    %445 = vmatprep.mubr.bf16.mxu0 0
    %446 = vmatmul.mubr.bf16.gmra.mrb[0].mxu0 %v391
    %v447 = vpop.f32.mrb[0].mxu0
    %v448 = vadd.f32 0.0, %v447
    %v449 = vpop.f32.mrb[0].mxu0
    %v450 = vpop.f32.mrb[0].mxu0
    %v451 = vadd.f32 0.0, %v450
    %v452 = vpop.f32.mrb[0].mxu0
    %453 = vmatprep.mubr.bf16.mxu0 0
    %454 = vmatmul.mubr.bf16.gmra.mrb[0].mxu0 %v394
    %v455 = vpop.f32.mrb[0].mxu0
    %v456 = vadd.f32 0.0, %v455
    %v457 = vpop.f32.mrb[0].mxu0
    %v458 = vpop.f32.mrb[0].mxu0
    %v459 = vadd.f32 0.0, %v458
    %v460 = vpop.f32.mrb[0].mxu0
    %461 = vmatprep.mubr.bf16.mxu0 0
    %462 = vmatmul.mubr.bf16.gmra.mrb[0].mxu0 %v397
    %v463 = vpop.f32.mrb[0].mxu0
    %v464 = vadd.f32 0.0, %v463
    %v465 = vpop.f32.mrb[0].mxu0
    %v466 = vpop.f32.mrb[0].mxu0
    %v467 = vadd.f32 0.0, %v466
    %v468 = vpop.f32.mrb[0].mxu0
    %469 = vmatprep.mubr.bf16.mxu0 0
    %470 = vmatmul.mubr.bf16.gmra.mrb[0].mxu0 %v400
    %v471 = vpop.f32.mrb[0].mxu0
    %v472 = vadd.f32 0.0, %v471
    %v473 = vpop.f32.mrb[0].mxu0
    %v474 = vpop.f32.mrb[0].mxu0
    %v475 = vadd.f32 0.0, %v474
    %v476 = vpop.f32.mrb[0].mxu0
    %477 = vmatprep.mubr.bf16.mxu0 0
    %478 = vmatmul.mubr.bf16.gmra.mrb[0].mxu0 %v403
    %v479 = vpop.f32.mrb[0].mxu0
    %v480 = vadd.f32 0.0, %v479
    %v481 = vpop.f32.mrb[0].mxu0
    %v482 = vpop.f32.mrb[0].mxu0
    %v483 = vadd.f32 0.0, %v482
    %v484 = vpop.f32.mrb[0].mxu0
    %485 = vdwg.mxu0
    %v486 = vmul.f32 %v440, %v440
    %v487 = vmul.f32 %v443, %v443
    %v488 = vmul.f32 %v448, %v448
    %v489 = vmul.f32 %v451, %v451
    %v490 = vmul.f32 %v456, %v456
    %v491 = vmul.f32 %v459, %v459
    %v492 = vmul.f32 %v464, %v464
    %v493 = vmul.f32 %v467, %v467
    %v494 = vmul.f32 %v472, %v472
    %v495 = vmul.f32 %v475, %v475
    %v496 = vmul.f32 %v480, %v480
    %v497 = vmul.f32 %v483, %v483
    %v498 = vsel %vm69, %v486, 0.0
    %v499 = vsel %vm69, %v487, 0.0
    %v500 = vadd.f32 %v498, %v499
    %v501 = vsel %vm69, %v488, 0.0
    %v502 = vadd.f32 %v500, %v501
    %v503 = vsel %vm69, %v489, 0.0
    %v504 = vadd.f32 %v502, %v503
    %v505 = vsel %vm69, %v490, 0.0
    %v506 = vadd.f32 %v504, %v505
    %v507 = vsel %vm69, %v491, 0.0
    %v508 = vadd.f32 %v506, %v507
    %v509 = vsel %vm69, %v492, 0.0
    %v510 = vadd.f32 %v508, %v509
    %v511 = vsel %vm69, %v493, 0.0
    %v512 = vadd.f32 %v510, %v511
    %v513 = vsel %vm69, %v494, 0.0
    %v514 = vadd.f32 %v512, %v513
    %v515 = vsel %vm69, %v495, 0.0
    %v516 = vadd.f32 %v514, %v515
    %v517 = vsel %vm69, %v496, 0.0
    %v518 = vadd.f32 %v516, %v517
    %v519 = vsel %vm69, %v497, 0.0
    %v520 = vadd.f32 %v518, %v519
    %521 = vadd.xlane.f32.xlu0 %v520
    %v522 = vpop.xlane.xlu0 %521
    %v523 = vrot.slane %v522, 4
    %v524 = vadd.f32 %v522, %v523
    %v525 = vrot.slane %v524, 2
    %v526 = vadd.f32 %v524, %v525
    %v527 = vrot.slane %v526, 1
    %v528 = vadd.f32 %v526, %v527
    %s529 = vtos %v528
    %s530 = scalar_lea.smem [#allocation3], 0
    %531 = sst [smem:[%s530]] %s529
    // Predicated region
    $region18: #{tpu_custom_call.1} parent=1 // pred_check
      _
    $region19: #{tpu_custom_call.1} parent=1 // pred_check_branch
      %533 = sbr.rel (0) target = $region21
    $region20: #{tpu_custom_call.1} parent=1 // pred_region
      %s535 = ssub.s32 16, 16
      %536 = vsyncadd [#allocation4], %s535
      %539 = dma.smem_to_hbm [#allocation3], 16, %s4, [#allocation4]
    $region21: #{tpu_custom_call.1} parent=1 // pred_fallthru
      _
    // Predicated region
    $region22: #{tpu_custom_call.1} parent=1 // pred_check
      _
    $region23: #{tpu_custom_call.1} parent=1 // pred_check_branch
      %541 = sbr.rel (0) target = $region25
    $region24: #{tpu_custom_call.1} parent=1 // pred_region
      %542 = dma.done [#allocation4], 16
    $region25: #{tpu_custom_call.1} parent=1 // pred_fallthru
      _
    %543 = sfence
    %544 = vsyncpa [#allocation4], 1

</llo_original>
